<compile_context>
chip_gen: v7x
topology: tpu7x:2x2x1
jax: 0.10.0
libtpu: 0.0.40
codegen_flags: <defaults>
</compile_context>

<pallas_src>
import math
from functools import partial

import jax
import jax.numpy as jnp
from jax.experimental import pallas as pl
from jax.experimental.pallas import tpu as pltpu


# --------------------------------------------------------------------------
# Small host-side helpers.
# --------------------------------------------------------------------------
def _round_up(x, m):
    return ((x + m - 1) // m) * m


def _tpu_kind():
    try:
        return jax.devices()[0].device_kind.lower()
    except Exception:
        return ""


def _vmem_capacity_bytes(kind):
    # v7x has 64 MiB VMEM per TensorCore; v5e/v6e (and older) have 128 MiB.
    if "v7" in kind:
        return 64 << 20
    return 128 << 20


def _choose_blocks(Sq, Skv, H, dh, *, in_itemsize, out_itemsize, vmem_budget,
                   block_q, block_kv):
    """Pick (bq, bkv) <= requested targets, multiples of 8, fitting the
    VMEM budget including the (H, bq, bkv) score/prob intermediates."""
    bq = min(_round_up(block_q, 8), _round_up(Sq, 8))
    bkv = min(_round_up(block_kv, 8), _round_up(Skv, 8))
    d_model = H * dh

    def est(bq_, bkv_):
        # double-buffered pipeline tiles (Q + K + V in, O out)
        tiles = 2 * (H * bq_ * dh * in_itemsize
                     + 2 * H * bkv_ * dh * in_itemsize
                     + bq_ * d_model * out_itemsize)
        # persistent scratch: merged m/l (lane dim pads to 128) + f32 acc
        scratch = H * bq_ * 128 * 4 + H * bq_ * dh * 4
        # live intermediates per step: s (f32) + p (bf16)
        interm = H * bq_ * bkv_ * (4 + 2)
        return tiles + scratch + interm

    while est(bq, bkv) > vmem_budget and bkv > 128:
        bkv = max(128, _round_up(bkv // 2, 8))
    while est(bq, bkv) > vmem_budget and bq > 64:
        bq = max(64, _round_up(bq // 2, 8))
    return bq, bkv, est(bq, bkv)


# --------------------------------------------------------------------------
# Kernel: flash-style cross-attention core (one batch element per grid step,
# all heads per step, online softmax over KV tiles).
# --------------------------------------------------------------------------
def _make_flash_kernel(n_heads, d_head, block_kv, skv_real, skv_padded,
                       exp_bf16):
    needs_mask = skv_padded != skv_real

    def kernel(q_ref, k_ref, v_ref, o_ref, ml_ref, acc_ref):
        # Shapes (after batch-dim squeeze):
        #   q_ref:   (H, bq,  dh)  bf16 (softmax scale already folded in)
        #   k_ref:   (H, bkv, dh)  bf16
        #   v_ref:   (H, bkv, dh)  bf16
        #   o_ref:   (bq, H*dh)    lane-dense output tile
        #   ml_ref:  (H, bq, 2)    f32: [...,0:1]=running max, [...,1:2]=denom
        #   acc_ref: (H, bq, dh)   f32 running numerator
        kv_idx = pl.program_id(2)
        H, bq, dh = acc_ref.shape

        @pl.when(kv_idx == 0)
        def _init():
            ml_ref[:, :, 0:1] = jnp.full((H, bq, 1), -jnp.inf, jnp.float32)
            ml_ref[:, :, 1:2] = jnp.zeros((H, bq, 1), jnp.float32)
            acc_ref[...] = jnp.zeros_like(acc_ref)

        # Scores on the MXU: bf16 operands, f32 accumulation.
        s = jnp.einsum("hqd,hkd->hqk", q_ref[...], k_ref[...],
                       preferred_element_type=jnp.float32)

        if needs_mask:
            # Mask keys beyond the real context length (padding added by the
            # wrapper so Skv divides the kv block size).
            key_pos = kv_idx * block_kv + jax.lax.broadcasted_iota(
                jnp.int32, (1, 1, block_kv), 2)
            s = jnp.where(key_pos < skv_real, s, jnp.float32(-1e30))

        m_prev = ml_ref[:, :, 0:1]
        l_prev = ml_ref[:, :, 1:2]
        m_new = jnp.maximum(m_prev, s.max(axis=-1, keepdims=True))
        alpha = jnp.exp(m_prev - m_new)                    # f32 rescale factor

        if exp_bf16:
            # v6e/v7x: bf16 EUP -> exp in bf16 (p already bf16 for the MXU).
            p = jnp.exp((s - m_new).astype(jnp.bfloat16))
            p_sum = jnp.sum(p, axis=-1, keepdims=True, dtype=jnp.float32)
        else:
            # v5e: no bf16 EUP/VPU -> keep elementwise math in f32, cast only
            # the MXU operand.
            p_f32 = jnp.exp(s - m_new)
            p_sum = jnp.sum(p_f32, axis=-1, keepdims=True)
            p = p_f32.astype(jnp.bfloat16)

        ml_ref[:, :, 1:2] = alpha * l_prev + p_sum
        acc_ref[...] = alpha * acc_ref[...] + jnp.einsum(
            "hqk,hkd->hqd", p, v_ref[...], preferred_element_type=jnp.float32)
        ml_ref[:, :, 0:1] = m_new

        @pl.when(kv_idx == pl.num_programs(2) - 1)
        def _finalize():
            inv_l = pl.reciprocal(ml_ref[:, :, 1:2], approx=True)  # EUP slot
            # Per-head lane-slice stores into the lane-dense output tile
            # (no big concatenate temp / transpose).
            for h in range(H):
                o_ref[:, h * d_head:(h + 1) * d_head] = (
                    acc_ref[h] * inv_l[h]).astype(o_ref.dtype)

    return kernel


def _flash_cross_attention(q, k, v, *, block_q, block_kv, out_dtype,
                           vmem_cap, exp_bf16):
    """q, k, v: (B, H, S, d_head) bf16; scale already folded into q.

    Returns (B, Sq, H*d_head) with heads concatenated along the last axis
    (the layout out_proj expects)."""
    B, H, Sq, dh = q.shape
    Skv = k.shape[2]
    d_model = H * dh

    bq, bkv, est = _choose_blocks(
        Sq, Skv, H, dh,
        in_itemsize=q.dtype.itemsize,
        out_itemsize=jnp.dtype(out_dtype).itemsize,
        vmem_budget=int(vmem_cap * 0.55),
        block_q=block_q, block_kv=block_kv)

    # Pad sequence lengths up to the block sizes (padded keys are masked
    # inside the kernel; padded query rows are sliced off below).
    Sq_pad = _round_up(Sq, bq)
    Skv_pad = _round_up(Skv, bkv)
    if Sq_pad != Sq:
        q = jnp.pad(q, ((0, 0), (0, 0), (0, Sq_pad - Sq), (0, 0)))
    if Skv_pad != Skv:
        k = jnp.pad(k, ((0, 0), (0, 0), (0, Skv_pad - Skv), (0, 0)))
        v = jnp.pad(v, ((0, 0), (0, 0), (0, Skv_pad - Skv), (0, 0)))

    grid = (B, Sq_pad // bq, Skv_pad // bkv)
    kernel = _make_flash_kernel(H, dh, bkv, Skv, Skv_pad, exp_bf16)

    q_spec = pl.BlockSpec((None, H, bq, dh), lambda b, qi, ki: (b, 0, qi, 0))
    # K/V index maps ignore the q-tile axis: when Skv fits in one KV block the
    # block index never changes, so context stays resident in VMEM.
    # (On v5e, if profiling shows exposed K/V DMA for long context, a deeper
    #  pipeline_mode=pl.Buffered(3) on these specs is the next lever.)
    k_spec = pl.BlockSpec((None, H, bkv, dh), lambda b, qi, ki: (b, 0, ki, 0))
    v_spec = pl.BlockSpec((None, H, bkv, dh), lambda b, qi, ki: (b, 0, ki, 0))
    o_spec = pl.BlockSpec((None, bq, d_model), lambda b, qi, ki: (b, qi, 0))

    # Explicit VMEM limit derived from the block arithmetic (with headroom),
    # instead of relying on the 16/32 MiB scoped defaults.
    vmem_limit = int(min(vmem_cap - (8 << 20), max(2 * est, 48 << 20)))

    out = pl.pallas_call(
        kernel,
        out_shape=jax.ShapeDtypeStruct((B, Sq_pad, d_model), out_dtype),
        grid_spec=pltpu.PrefetchScalarGridSpec(
            num_scalar_prefetch=0,
            grid=grid,
            in_specs=[q_spec, k_spec, v_spec],
            out_specs=o_spec,
            scratch_shapes=[
                pltpu.VMEM((H, bq, 2), jnp.float32),   # running max + denom
                pltpu.VMEM((H, bq, dh), jnp.float32),  # running numerator
            ],
        ),
        compiler_params=pltpu.CompilerParams(
            dimension_semantics=("parallel", "parallel", "arbitrary"),
            vmem_limit_bytes=vmem_limit,
        ),
    )(q, k, v)
    return out[:, :Sq, :]


# --------------------------------------------------------------------------
# Full module forward (projections in XLA, attention core in Pallas).
# --------------------------------------------------------------------------
def cross_attention_forward(latent, context, params, n_heads,
                            *, block_q=256, block_kv=512):
    B, Sq, d_embed = latent.shape
    d_head = d_embed // n_heads

    kind = _tpu_kind()
    vmem_cap = _vmem_capacity_bytes(kind)
    exp_bf16 = ("v6" in kind) or ("v7" in kind)   # bf16 EUP only on v6e/v7x

    # Fold the 1/sqrt(d_head) softmax scale into the Q projection weights
    # (tiny weight-only op; no extra full-activation multiply).
    scale = 1.0 / math.sqrt(d_head)
    q = latent @ (params["wq"] * scale) + params["bq"] * scale  # (B, Sq, d_embed)
    k = context @ params["wk"] + params["bk"]                   # (B, Skv, d_embed)
    v = context @ params["wv"] + params["bv"]                   # (B, Skv, d_embed)

    def split_heads(x):
        b, s, _ = x.shape
        return x.reshape(b, s, n_heads, d_head).transpose(0, 2, 1, 3)

    # bf16 MXU operands (also halves K/V HBM traffic); f32 accumulation
    # happens inside the kernel.
    qh = split_heads(q).astype(jnp.bfloat16)
    kh = split_heads(k).astype(jnp.bfloat16)
    vh = split_heads(v).astype(jnp.bfloat16)

    attn = _flash_cross_attention(
        qh, kh, vh, block_q=block_q, block_kv=block_kv,
        out_dtype=latent.dtype, vmem_cap=vmem_cap, exp_bf16=exp_bf16,
    )  # (B, Sq, d_embed), heads already merged on the lane axis

    # NOTE: the reference PyTorch forward omits the reshape back to
    # (B, Sq, d_embed) before out_proj (and super().__init__()); the intended
    # standard cross-attention semantics is implemented here.
    return attn @ params["wo"] + params["bo"]


# --------------------------------------------------------------------------
# Pure-JAX reference (for correctness check only).
# --------------------------------------------------------------------------
def _reference_forward(latent, context, params, n_heads):
    B, Sq, d_embed = latent.shape
    d_head = d_embed // n_heads
    q = latent @ params["wq"] + params["bq"]
    k = context @ params["wk"] + params["bk"]
    v = context @ params["wv"] + params["bv"]

    def split_heads(x):
        b, s, _ = x.shape
        return x.reshape(b, s, n_heads, d_head).transpose(0, 2, 1, 3)

    qh, kh, vh = split_heads(q), split_heads(k), split_heads(v)
    w = jnp.einsum("bhqd,bhkd->bhqk", qh, kh) / math.sqrt(d_head)
    w = jax.nn.softmax(w, axis=-1)
    o = jnp.einsum("bhqk,bhkd->bhqd", w, vh)
    o = o.transpose(0, 2, 1, 3).reshape(B, Sq, d_embed)
    return o @ params["wo"] + params["bo"]


if __name__ == "__main__":
    key = jax.random.PRNGKey(0)
    B, n_heads, d_embed, d_cross = 2, 2, 64, 48
    # Non-multiples of the block sizes on purpose: exercises the wrapper
    # padding and the in-kernel key-masking path.
    Sq, Skv = 20, 28
    ks = jax.random.split(key, 10)

    latent = jax.random.normal(ks[0], (B, Sq, d_embed), jnp.float32)
    context = jax.random.normal(ks[1], (B, Skv, d_cross), jnp.float32)
    params = {
        "wq": jax.random.normal(ks[2], (d_embed, d_embed), jnp.float32) / math.sqrt(d_embed),
        "bq": 0.1 * jax.random.normal(ks[3], (d_embed,), jnp.float32),
        "wk": jax.random.normal(ks[4], (d_cross, d_embed), jnp.float32) / math.sqrt(d_cross),
        "bk": 0.1 * jax.random.normal(ks[5], (d_embed,), jnp.float32),
        "wv": jax.random.normal(ks[6], (d_cross, d_embed), jnp.float32) / math.sqrt(d_cross),
        "bv": 0.1 * jax.random.normal(ks[7], (d_embed,), jnp.float32),
        "wo": jax.random.normal(ks[8], (d_embed, d_embed), jnp.float32) / math.sqrt(d_embed),
        "bo": 0.1 * jax.random.normal(ks[9], (d_embed,), jnp.float32),
    }

    # Small blocks so the demo exercises multiple q tiles, the kv accumulation
    # loop, and the padded-key masking (grid = (2, 3, 2)).
    fwd = jax.jit(partial(cross_attention_forward, n_heads=n_heads,
                          block_q=8, block_kv=16))
    out = jax.block_until_ready(fwd(latent, context, params))

    ref = jax.block_until_ready(_reference_forward(latent, context, params, n_heads))
    assert out.shape == (B, Sq, d_embed), out.shape
    max_err = float(jnp.max(jnp.abs(out - ref)))
    # bf16 MXU operands + approx reciprocal vs an f32 reference.
    assert max_err < 1e-1, f"max abs error too large: {max_err}"
    print("KERNEL_OK")
</pallas_src>

<mosaic_0001>
module attributes {stable_mosaic.version = 11 : i64} {
  func.func @kernel(%arg0: i32, %arg1: i32, %arg2: i32, %arg3: memref<1x2x8x32xbf16, #tpu.memory_space<vmem>>, %arg4: memref<1x2x16x32xbf16, #tpu.memory_space<vmem>>, %arg5: memref<1x2x16x32xbf16, #tpu.memory_space<vmem>>, %arg6: memref<1x8x64xf32, #tpu.memory_space<vmem>>, %arg7: memref<2x8x2xf32, #tpu.memory_space<vmem>>, %arg8: memref<2x8x32xf32, #tpu.memory_space<vmem>>) attributes {dimension_semantics = [#tpu.dimension_semantics<parallel>, #tpu.dimension_semantics<parallel>, #tpu.dimension_semantics<arbitrary>], iteration_bounds = array<i64: 2, 3, 2>, scalar_prefetch = 0 : i64, scratch_operands = 2 : i64, tpu.core_type = #tpu.core_type<tc>, window_params = [{transform_indices = @transform_0, window_bounds = array<i64: 1, 2, 8, 32>}, {transform_indices = @transform_1, window_bounds = array<i64: 1, 2, 16, 32>}, {transform_indices = @transform_2, window_bounds = array<i64: 1, 2, 16, 32>}, {transform_indices = @transform_3, window_bounds = array<i64: 1, 8, 64>}]} {
    %c0_i32 = arith.constant 0 : i32
    %0 = arith.cmpi eq, %arg2, %c0_i32 : i32
    %1 = arith.extui %0 : i1 to i32
    %c0_i32_0 = arith.constant 0 : i32
    %2 = arith.cmpi ne, %1, %c0_i32_0 : i32
    scf.if %2 {
      %cst_34 = arith.constant 0xFF800000 : f32
      %46 = vector.broadcast %cst_34 : f32 to vector<2x8x1xf32>
      %c0_35 = arith.constant 0 : index
      %c0_36 = arith.constant 0 : index
      %c0_37 = arith.constant 0 : index
      %47 = vector.load %arg7[%c0_35, %c0_36, %c0_37] : memref<2x8x2xf32, #tpu.memory_space<vmem>>, vector<2x8x1xf32>
      tpu.vector_store %arg7[%c0_35, %c0_36, %c0_37], %46 {strides = array<i32>} : memref<2x8x2xf32, #tpu.memory_space<vmem>>, vector<2x8x1xf32>,
      %cst_38 = arith.constant 0.000000e+00 : f32
      %48 = vector.broadcast %cst_38 : f32 to vector<2x8x1xf32>
      %c0_39 = arith.constant 0 : index
      %c0_40 = arith.constant 0 : index
      %c1_41 = arith.constant 1 : index
      %49 = vector.load %arg7[%c0_39, %c0_40, %c1_41] : memref<2x8x2xf32, #tpu.memory_space<vmem>>, vector<2x8x1xf32>
      tpu.vector_store %arg7[%c0_39, %c0_40, %c1_41], %48 {strides = array<i32>} : memref<2x8x2xf32, #tpu.memory_space<vmem>>, vector<2x8x1xf32>,
      %cst_42 = arith.constant 0.000000e+00 : f32
      %50 = vector.broadcast %cst_42 : f32 to vector<2x8x32xf32>
      %c0_43 = arith.constant 0 : index
      %c0_44 = arith.constant 0 : index
      %c0_45 = arith.constant 0 : index
      %51 = vector.load %arg8[%c0_43, %c0_44, %c0_45] : memref<2x8x32xf32, #tpu.memory_space<vmem>>, vector<2x8x32xf32>
      tpu.vector_store %arg8[%c0_43, %c0_44, %c0_45], %50 {strides = array<i32>} : memref<2x8x32xf32, #tpu.memory_space<vmem>>, vector<2x8x32xf32>,
    } else {
    }
    %c0 = arith.constant 0 : index
    %c0_1 = arith.constant 0 : index
    %c0_2 = arith.constant 0 : index
    %c0_3 = arith.constant 0 : index
    %3 = vector.load %arg3[%c0, %c0_1, %c0_2, %c0_3] : memref<1x2x8x32xbf16, #tpu.memory_space<vmem>>, vector<1x2x8x32xbf16>
    %4 = vector.shape_cast %3 : vector<1x2x8x32xbf16> to vector<2x8x32xbf16>
    %c0_4 = arith.constant 0 : index
    %c0_5 = arith.constant 0 : index
    %c0_6 = arith.constant 0 : index
    %c0_7 = arith.constant 0 : index
    %5 = vector.load %arg4[%c0_4, %c0_5, %c0_6, %c0_7] : memref<1x2x16x32xbf16, #tpu.memory_space<vmem>>, vector<1x2x16x32xbf16>
    %6 = vector.shape_cast %5 : vector<1x2x16x32xbf16> to vector<2x16x32xbf16>
    "tpu.trace_start"() <{level = 10 : i32, message = "hqd,hkd->hqk"}> : () -> ()
    %cst = arith.constant dense<0.000000e+00> : vector<2x8x16xf32>
    %7 = tpu.matmul %4, %6, %cst {dimension_numbers = #tpu.dot_dimension_numbers<[2], [2], [1], [1], [0, 0, 0, 1, 1, 1], [0], [0]>} : vector<2x8x32xbf16>, vector<2x16x32xbf16>, vector<2x8x16xf32> -> vector<2x8x16xf32>
    "tpu.trace_stop"() : () -> ()
    %c16_i32 = arith.constant 16 : i32
    %8 = arith.muli %arg2, %c16_i32 : i32
    %9 = tpu.iota {dimensions = array<i32: 2>} : vector<1x1x16xi32>
    %10 = vector.broadcast %8 : i32 to vector<1x1x16xi32>
    %11 = arith.addi %10, %9 : vector<1x1x16xi32>
    %c28_i32 = arith.constant 28 : i32
    %12 = vector.broadcast %c28_i32 : i32 to vector<1x1x16xi32>
    %13 = arith.cmpi slt, %11, %12 : vector<1x1x16xi32>
    %cst_8 = arith.constant -1.000000e+30 : f32
    %14 = vector.shape_cast %13 : vector<1x1x16xi1> to vector<1x1x16xi1>
    %15 = vector.broadcast %14 : vector<1x1x16xi1> to vector<2x8x16xi1>
    %16 = vector.broadcast %cst_8 : f32 to vector<2x8x16xf32>
    %17 = arith.select %15, %7, %16 : vector<2x8x16xi1>, vector<2x8x16xf32>
    %c0_9 = arith.constant 0 : index
    %c0_10 = arith.constant 0 : index
    %c0_11 = arith.constant 0 : index
    %18 = vector.load %arg7[%c0_9, %c0_10, %c0_11] : memref<2x8x2xf32, #tpu.memory_space<vmem>>, vector<2x8x1xf32>
    %c0_12 = arith.constant 0 : index
    %c0_13 = arith.constant 0 : index
    %c1 = arith.constant 1 : index
    %19 = vector.load %arg7[%c0_12, %c0_13, %c1] : memref<2x8x2xf32, #tpu.memory_space<vmem>>, vector<2x8x1xf32>
    %cst_14 = arith.constant dense<0xFF800000> : vector<2x8xf32>
    %20 = vector.multi_reduction <maximumf>, %17, %cst_14 [2] : vector<2x8x16xf32> to vector<2x8xf32>
    %21 = vector.shape_cast %20 : vector<2x8xf32> to vector<2x8x1xf32>
    %22 = arith.maximumf %18, %21 : vector<2x8x1xf32>
    %23 = arith.subf %18, %22 : vector<2x8x1xf32>
    %24 = math.exp %23 : vector<2x8x1xf32>
    %25 = vector.broadcast %22 : vector<2x8x1xf32> to vector<2x8x16xf32>
    %26 = arith.subf %17, %25 : vector<2x8x16xf32>
    %27 = math.exp %26 : vector<2x8x16xf32>
    %cst_15 = arith.constant dense<0.000000e+00> : vector<2x8xf32>
    %28 = vector.multi_reduction <add>, %27, %cst_15 [2] : vector<2x8x16xf32> to vector<2x8xf32>
    %29 = vector.shape_cast %28 : vector<2x8xf32> to vector<2x8x1xf32>
    %30 = arith.truncf %27 : vector<2x8x16xf32> to vector<2x8x16xbf16>
    %31 = arith.mulf %24, %19 : vector<2x8x1xf32>
    %32 = arith.addf %31, %29 : vector<2x8x1xf32>
    %c0_16 = arith.constant 0 : index
    %c0_17 = arith.constant 0 : index
    %c1_18 = arith.constant 1 : index
    %33 = vector.load %arg7[%c0_16, %c0_17, %c1_18] : memref<2x8x2xf32, #tpu.memory_space<vmem>>, vector<2x8x1xf32>
    tpu.vector_store %arg7[%c0_16, %c0_17, %c1_18], %32 {strides = array<i32>} : memref<2x8x2xf32, #tpu.memory_space<vmem>>, vector<2x8x1xf32>,
    %c0_19 = arith.constant 0 : index
    %c0_20 = arith.constant 0 : index
    %c0_21 = arith.constant 0 : index
    %34 = vector.load %arg8[%c0_19, %c0_20, %c0_21] : memref<2x8x32xf32, #tpu.memory_space<vmem>>, vector<2x8x32xf32>
    %35 = vector.broadcast %24 : vector<2x8x1xf32> to vector<2x8x32xf32>
    %36 = arith.mulf %35, %34 : vector<2x8x32xf32>
    %c0_22 = arith.constant 0 : index
    %c0_23 = arith.constant 0 : index
    %c0_24 = arith.constant 0 : index
    %c0_25 = arith.constant 0 : index
    %37 = vector.load %arg5[%c0_22, %c0_23, %c0_24, %c0_25] : memref<1x2x16x32xbf16, #tpu.memory_space<vmem>>, vector<1x2x16x32xbf16>
    %38 = vector.shape_cast %37 : vector<1x2x16x32xbf16> to vector<2x16x32xbf16>
    "tpu.trace_start"() <{level = 10 : i32, message = "hqk,hkd->hqd"}> : () -> ()
    %cst_26 = arith.constant dense<0.000000e+00> : vector<2x8x32xf32>
    %39 = tpu.matmul %30, %38, %cst_26 {dimension_numbers = #tpu.dot_dimension_numbers<[2], [1], [1], [2], [0, 0, 0, 1, 1, 2], [0], [0]>} : vector<2x8x16xbf16>, vector<2x16x32xbf16>, vector<2x8x32xf32> -> vector<2x8x32xf32>
    "tpu.trace_stop"() : () -> ()
    %40 = arith.addf %36, %39 : vector<2x8x32xf32>
    %c0_27 = arith.constant 0 : index
    %c0_28 = arith.constant 0 : index
    %c0_29 = arith.constant 0 : index
    %41 = vector.load %arg8[%c0_27, %c0_28, %c0_29] : memref<2x8x32xf32, #tpu.memory_space<vmem>>, vector<2x8x32xf32>
    tpu.vector_store %arg8[%c0_27, %c0_28, %c0_29], %40 {strides = array<i32>} : memref<2x8x32xf32, #tpu.memory_space<vmem>>, vector<2x8x32xf32>,
    %c0_30 = arith.constant 0 : index
    %c0_31 = arith.constant 0 : index
    %c0_32 = arith.constant 0 : index
    %42 = vector.load %arg7[%c0_30, %c0_31, %c0_32] : memref<2x8x2xf32, #tpu.memory_space<vmem>>, vector<2x8x1xf32>
    tpu.vector_store %arg7[%c0_30, %c0_31, %c0_32], %22 {strides = array<i32>} : memref<2x8x2xf32, #tpu.memory_space<vmem>>, vector<2x8x1xf32>,
    %c1_i32 = arith.constant 1 : i32
    %43 = arith.cmpi eq, %arg2, %c1_i32 : i32
    %44 = arith.extui %43 : i1 to i32
    %c0_i32_33 = arith.constant 0 : i32
    %45 = arith.cmpi ne, %44, %c0_i32_33 : i32
    scf.if %45 {
      %c0_34 = arith.constant 0 : index
      %c0_35 = arith.constant 0 : index
      %c1_36 = arith.constant 1 : index
      %46 = vector.load %arg7[%c0_34, %c0_35, %c1_36] : memref<2x8x2xf32, #tpu.memory_space<vmem>>, vector<2x8x1xf32>
      %47 = tpu.reciprocal %46 {approx = true} : vector<2x8x1xf32> -> vector<2x8x1xf32>
      %c0_37 = arith.constant 0 : index
      %c0_38 = arith.constant 0 : index
      %c0_39 = arith.constant 0 : index
      %48 = vector.load %arg8[%c0_37, %c0_38, %c0_39] : memref<2x8x32xf32, #tpu.memory_space<vmem>>, vector<1x8x32xf32>
      %49 = vector.shape_cast %48 : vector<1x8x32xf32> to vector<8x32xf32>
      %50 = vector.extract_strided_slice %47 {offsets = [0, 0, 0], sizes = [1, 8, 1], strides = [1, 1, 1]} : vector<2x8x1xf32> to vector<1x8x1xf32>
      %51 = vector.shape_cast %50 : vector<1x8x1xf32> to vector<8x1xf32>
      %52 = vector.broadcast %51 : vector<8x1xf32> to vector<8x32xf32>
      %53 = arith.mulf %49, %52 : vector<8x32xf32>
      %c0_40 = arith.constant 0 : index
      %c0_41 = arith.constant 0 : index
      %c0_42 = arith.constant 0 : index
      %54 = vector.load %arg6[%c0_40, %c0_41, %c0_42] : memref<1x8x64xf32, #tpu.memory_space<vmem>>, vector<1x8x32xf32>
      %55 = vector.shape_cast %54 : vector<1x8x32xf32> to vector<8x32xf32>
      %56 = vector.shape_cast %53 : vector<8x32xf32> to vector<1x8x32xf32>
      tpu.vector_store %arg6[%c0_40, %c0_41, %c0_42], %56 {strides = array<i32>} : memref<1x8x64xf32, #tpu.memory_space<vmem>>, vector<1x8x32xf32>,
      %c1_43 = arith.constant 1 : index
      %c0_44 = arith.constant 0 : index
      %c0_45 = arith.constant 0 : index
      %57 = vector.load %arg8[%c1_43, %c0_44, %c0_45] : memref<2x8x32xf32, #tpu.memory_space<vmem>>, vector<1x8x32xf32>
      %58 = vector.shape_cast %57 : vector<1x8x32xf32> to vector<8x32xf32>
      %59 = vector.extract_strided_slice %47 {offsets = [1, 0, 0], sizes = [1, 8, 1], strides = [1, 1, 1]} : vector<2x8x1xf32> to vector<1x8x1xf32>
      %60 = vector.shape_cast %59 : vector<1x8x1xf32> to vector<8x1xf32>
      %61 = vector.broadcast %60 : vector<8x1xf32> to vector<8x32xf32>
      %62 = arith.mulf %58, %61 : vector<8x32xf32>
      %c0_46 = arith.constant 0 : index
      %c0_47 = arith.constant 0 : index
      %c32 = arith.constant 32 : index
      %63 = vector.load %arg6[%c0_46, %c0_47, %c32] : memref<1x8x64xf32, #tpu.memory_space<vmem>>, vector<1x8x32xf32>
      %64 = vector.shape_cast %63 : vector<1x8x32xf32> to vector<8x32xf32>
      %65 = vector.shape_cast %62 : vector<8x32xf32> to vector<1x8x32xf32>
      tpu.vector_store %arg6[%c0_46, %c0_47, %c32], %65 {strides = array<i32>} : memref<1x8x64xf32, #tpu.memory_space<vmem>>, vector<1x8x32xf32>,
    } else {
    }
    return
  }
  func.func @transform_0(%arg0: i32, %arg1: i32, %arg2: i32) -> (i32, i32, i32, i32) {
    %c0_i32 = arith.constant 0 : i32
    %c0_i32_0 = arith.constant 0 : i32
    %c0_i32_1 = arith.constant 0 : i32
    return %arg0, %c0_i32, %arg1, %c0_i32_0 : i32, i32, i32, i32
  }
  func.func @transform_1(%arg0: i32, %arg1: i32, %arg2: i32) -> (i32, i32, i32, i32) {
    %c0_i32 = arith.constant 0 : i32
    %c0_i32_0 = arith.constant 0 : i32
    %c0_i32_1 = arith.constant 0 : i32
    return %arg0, %c0_i32, %arg2, %c0_i32_0 : i32, i32, i32, i32
  }
  func.func @transform_2(%arg0: i32, %arg1: i32, %arg2: i32) -> (i32, i32, i32, i32) {
    %c0_i32 = arith.constant 0 : i32
    %c0_i32_0 = arith.constant 0 : i32
    %c0_i32_1 = arith.constant 0 : i32
    return %arg0, %c0_i32, %arg2, %c0_i32_0 : i32, i32, i32, i32
  }
  func.func @transform_3(%arg0: i32, %arg1: i32, %arg2: i32) -> (i32, i32, i32) {
    %c0_i32 = arith.constant 0 : i32
    %c0_i32_0 = arith.constant 0 : i32
    return %arg0, %arg1, %c0_i32 : i32, i32, i32
  }
}

</mosaic_0001>

<llo_original>
// kernel: cross_attention_forward.1
$region0: #{cross_attention_forward.1}
  #allocation0 [shape = 'u32[]', space=smem, size = 0x4, offset = 0x4, fixed_abs, tag = 'smem constant byte address 0x4 - core index']
  #allocation1 [shape = 'u32[144,128]{1,0:T(1,128)}', space=vmem, size = 0x12000, scoped, tag = 'internal scratch']
  #allocation2 [shape = 'f32[2,8,2]{2,1,0:T(8,128)}', space=vmem, size = 0x2000, scoped, tag = 'scratch operand']
  #allocation3 [shape = 'f32[2,8,32]{2,1,0:T(8,128)}', space=vmem, size = 0x2000, scoped, tag = 'scratch operand']
  %s0 = inlined_call_operand.vmem [shape: bf16[2,2,24,32], index: 0, kind: input, shape index: {}]
  %s1 = inlined_call_operand.vmem [shape: bf16[2,2,32,32], index: 1, kind: input, shape index: {}]
  %s2 = inlined_call_operand.vmem [shape: bf16[2,2,32,32], index: 2, kind: input, shape index: {}]
  %s3 = inlined_call_operand.vmem [shape: f32[2,24,64], index: 3, kind: output, shape index: {}]
  %s4 = sld [smem:[#allocation0]]
  $region176: #{cross_attention_forward.1} parent=0
    _
  %s6 = ssub.s32 1, %s4
  %s7 = scalar_select 0, %s6, %s4
  $region1: #{cross_attention_forward.1} parent=0
    #allocation4 [shape = 'u8[8192]{0}', space=vmem, size = 0x2000, scoped, tag = 'input window, operand 0']
    #allocation5 [shape = 'u8[16384]{0}', space=vmem, size = 0x4000, scoped, tag = 'input window, operand 1']
    #allocation6 [shape = 'u8[16384]{0}', space=vmem, size = 0x4000, scoped, tag = 'input window, operand 2']
    loop: start=0, step=1, limit=14
    $region2: #{cross_attention_forward.1} parent=1 // loop_pre_header
      _
    $region3: #{cross_attention_forward.1} parent=1 // loop_header
      %s9 = sphi 0, %s13
      %p10 = scmp.ge.s32.totalorder %s9, 14
      %s16 = sphi 0, %s35
      %s17 = sphi 0, %s31
      %s18 = sphi 0, %s27
      %s19 = sphi 0, %s16
      %s20 = sphi 0, %s17
      %s21 = sphi 0, %s18
      %s22 = sphi 0, %s19
      %s23 = sphi 0, %s20
      %s24 = sphi 0, %s21
      %s40 = sphi 0, %s42
      %s43 = sphi 0, %s40
      %s44 = sphi 0, %s43
      %s60 = sphi 0, %s44
      %s68 = sphi 0, %s70
      %s71 = sphi 0, %s68
      %s72 = sphi 0, %s71
      %s88 = sphi 0, %s72
      %s96 = sphi 0, %s98
      %s99 = sphi 0, %s96
      %s100 = sphi 0, %s99
      %s116 = sphi 0, %s100
      %s124 = sphi 0, %s126
      %s127 = sphi 0, %s124
      %s128 = sphi 0, %s127
      %s144 = sphi 0, %s128
    $region4: #{cross_attention_forward.1} parent=1 // loop_header_branch
      %12 = sbr.rel (%p10) target = $region8
    $region5: #{cross_attention_forward.1} parent=1 // loop_body
      %s14 = ssub.s32 %s9, 1
      %s15 = ssub.s32 %s9, 2
      %s25 = sadd.s32 1, %s18
      %p26 = scmp.ge.s32.totalorder %s25, 2
      %s27 = scalar_select %p26, 0, %s25
      %s28 = sadd.s32 1, %s17
      %s29 = scalar_select %p26, %s28, %s17
      %p30 = scmp.ge.s32.totalorder %s29, 3
      %s31 = scalar_select %p30, 0, %s29
      %s32 = sadd.s32 1, %s16
      %s33 = scalar_select %p30, %s32, %s16
      %p34 = scmp.ge.s32.totalorder %s33, 2
      %s35 = scalar_select %p34, 0, %s33
      %s36 = ssub.s32 %s16, %s35
      %s37 = ssub.s32 %s17, %s31
      %s38 = sor.u32 %s36, %s37
      %p39 = scmp.eq.s32.totalorder %s38, 0
      %s41 = sadd.s32 %s40, 1
      %s42 = scalar_select %p39, %s40, %s41
      %p45 = pneg %p39
      %p46 = scmp.eq.s32.totalorder %s9, 11
      %p47 = por %p45, %p46
      %p48 = scmp.ne.s32.totalorder %s40, %s43
      %p49 = scmp.eq.s32.totalorder %s9, 0
      %p50 = por %p48, %p49
      %p51 = scmp.ne.s32.totalorder %s40, %s43
      %p52 = scmp.eq.s32.totalorder %s14, 11
      %p53 = por %p51, %p52
      %p54 = scmp.ne.s32.totalorder %s43, %s44
      %p55 = scmp.eq.s32.totalorder %s14, 0
      %p56 = por %p54, %p55
      %p57 = scmp.ne.s32.totalorder %s43, %s44
      %p58 = scmp.eq.s32.totalorder %s15, 11
      %p59 = por %p57, %p58
      %p61 = scmp.ne.s32.totalorder %s44, %s60
      %p62 = scmp.eq.s32.totalorder %s15, 0
      %p63 = por %p61, %p62
      %s64 = ssub.s32 %s16, %s35
      %s65 = ssub.s32 %s18, %s27
      %s66 = sor.u32 %s64, %s65
      %p67 = scmp.eq.s32.totalorder %s66, 0
      %s69 = sadd.s32 %s68, 1
      %s70 = scalar_select %p67, %s68, %s69
      %p73 = pneg %p67
      %p74 = scmp.eq.s32.totalorder %s9, 11
      %p75 = por %p73, %p74
      %p76 = scmp.ne.s32.totalorder %s68, %s71
      %p77 = scmp.eq.s32.totalorder %s9, 0
      %p78 = por %p76, %p77
      %p79 = scmp.ne.s32.totalorder %s68, %s71
      %p80 = scmp.eq.s32.totalorder %s14, 11
      %p81 = por %p79, %p80
      %p82 = scmp.ne.s32.totalorder %s71, %s72
      %p83 = scmp.eq.s32.totalorder %s14, 0
      %p84 = por %p82, %p83
      %p85 = scmp.ne.s32.totalorder %s71, %s72
      %p86 = scmp.eq.s32.totalorder %s15, 11
      %p87 = por %p85, %p86
      %p89 = scmp.ne.s32.totalorder %s72, %s88
      %p90 = scmp.eq.s32.totalorder %s15, 0
      %p91 = por %p89, %p90
      %s92 = ssub.s32 %s16, %s35
      %s93 = ssub.s32 %s18, %s27
      %s94 = sor.u32 %s92, %s93
      %p95 = scmp.eq.s32.totalorder %s94, 0
      %s97 = sadd.s32 %s96, 1
      %s98 = scalar_select %p95, %s96, %s97
      %p101 = pneg %p95
      %p102 = scmp.eq.s32.totalorder %s9, 11
      %p103 = por %p101, %p102
      %p104 = scmp.ne.s32.totalorder %s96, %s99
      %p105 = scmp.eq.s32.totalorder %s9, 0
      %p106 = por %p104, %p105
      %p107 = scmp.ne.s32.totalorder %s96, %s99
      %p108 = scmp.eq.s32.totalorder %s14, 11
      %p109 = por %p107, %p108
      %p110 = scmp.ne.s32.totalorder %s99, %s100
      %p111 = scmp.eq.s32.totalorder %s14, 0
      %p112 = por %p110, %p111
      %p113 = scmp.ne.s32.totalorder %s99, %s100
      %p114 = scmp.eq.s32.totalorder %s15, 11
      %p115 = por %p113, %p114
      %p117 = scmp.ne.s32.totalorder %s100, %s116
      %p118 = scmp.eq.s32.totalorder %s15, 0
      %p119 = por %p117, %p118
      %s120 = ssub.s32 %s16, %s35
      %s121 = ssub.s32 %s17, %s31
      %s122 = sor.u32 %s120, %s121
      %p123 = scmp.eq.s32.totalorder %s122, 0
      %s125 = sadd.s32 %s124, 1
      %s126 = scalar_select %p123, %s124, %s125
      %p129 = pneg %p123
      %p130 = scmp.eq.s32.totalorder %s9, 11
      %p131 = por %p129, %p130
      %p132 = scmp.ne.s32.totalorder %s124, %s127
      %p133 = scmp.eq.s32.totalorder %s9, 0
      %p134 = por %p132, %p133
      %p135 = scmp.ne.s32.totalorder %s124, %s127
      %p136 = scmp.eq.s32.totalorder %s14, 11
      %p137 = por %p135, %p136
      %p138 = scmp.ne.s32.totalorder %s127, %s128
      %p139 = scmp.eq.s32.totalorder %s14, 0
      %p140 = por %p138, %p139
      %p141 = scmp.ne.s32.totalorder %s127, %s128
      %p142 = scmp.eq.s32.totalorder %s15, 11
      %p143 = por %p141, %p142
      %p145 = scmp.ne.s32.totalorder %s128, %s144
      %p146 = scmp.eq.s32.totalorder %s15, 0
      %p147 = por %p145, %p146
      %p148 = scmp.le.s32.totalorder 1, %s9
      %p149 = scmp.lt.s32.totalorder %s9, 13
      %p150 = pnand %p148, %p149
      %p151 = pneg %p150
      // Predicated region
      $region9: #{cross_attention_forward.1} parent=5 // pred_check
        _
      $region10: #{cross_attention_forward.1} parent=5 // pred_check_branch
        %153 = sbr.rel (%p150) target = $region12
      $region11: #{cross_attention_forward.1} parent=5 // pred_region
        %s154 = ssub.s32 %s9, 1
      $region12: #{cross_attention_forward.1} parent=5 // pred_fallthru
        _
      %p155 = scmp.lt.s32.totalorder %s9, 12
      // Predicated region
      $region13: #{cross_attention_forward.1} parent=5 // pred_check
        %p156 = pneg %p155
      $region14: #{cross_attention_forward.1} parent=5 // pred_check_branch
        %158 = sbr.rel (%p156) target = $region16
      $region15: #{cross_attention_forward.1} parent=5 // pred_region
        // Predicated region
        $region17: #{cross_attention_forward.1} parent=15 // pred_check
          %p159 = pneg %p50
        $region18: #{cross_attention_forward.1} parent=15 // pred_check_branch
          %161 = sbr.rel (%p159) target = $region20
        $region19: #{cross_attention_forward.1} parent=15 // pred_region
          %s162 = sand.u32 %s40, 1
          %s163 = sand.u32 %s40, 1
          %s164 = smul.addr %s163, 8
          %s165 = scalar_lea.vmem [#allocation4], %s164
          %s166 = smul.addr %s16, 6
          %s167 = sadd.s32 %s17, %s166
          %s168 = smul.addr %s167, 4
          %s169 = scalar_lea.vmem %s0, %s168
          // Predicated region
          $region21: #{cross_attention_forward.1} parent=19 // pred_check
            _
          $region22: #{cross_attention_forward.1} parent=19 // pred_check_branch
            %171 = sbr.rel (0) target = $region24
          $region23: #{cross_attention_forward.1} parent=19 // pred_region
            // Predicated region
            $region25: #{cross_attention_forward.1} parent=23 // pred_check
              _
            $region26: #{cross_attention_forward.1} parent=23 // pred_check_branch
              %173 = sbr.rel target = $region28
            $region27: #{cross_attention_forward.1} parent=23 // pred_region
              // Predicated region
              $region40: #{cross_attention_forward.1} parent=27 // pred_check
                _
              $region41: #{cross_attention_forward.1} parent=27 // pred_check_branch
                %190 = sbr.rel (0) target = $region43
              $region42: #{cross_attention_forward.1} parent=27 // pred_region
                loop: start=0, step=1, limit=1
                $region44: #{cross_attention_forward.1} parent=42 // loop_pre_header
                  _
                $region45: #{cross_attention_forward.1} parent=42 // loop_header
                  %s192 = sphi 0, %s196
                  %p193 = scmp.ge.s32.totalorder %s192, 1
                  %s197 = sphi %s169, %s169
                  %s198 = sphi %s165, %s165
                $region46: #{cross_attention_forward.1} parent=42 // loop_header_branch
                  %195 = sbr.rel (%p193) target = $region50
                $region47: #{cross_attention_forward.1} parent=42 // loop_body
                  _
                $region48: #{cross_attention_forward.1} parent=42 // loop_footer
                  %s196 = sadd.s32 1, %s192
                $region49: #{cross_attention_forward.1} parent=42 // loop_footer_branch
                  %191 = sbr.rel target = $region45
                $region50: #{cross_attention_forward.1} parent=42 // loop_exit
                  _
                loop: start=0, step=1, limit=1
                $region51: #{cross_attention_forward.1} parent=42 // loop_pre_header
                  _
                $region52: #{cross_attention_forward.1} parent=42 // loop_header
                  %s201 = sphi 0, %s205
                  %p202 = scmp.ge.s32.totalorder %s201, 1
                  %s206 = sphi %s169, %s169
                  %s207 = sphi %s165, %s165
                $region53: #{cross_attention_forward.1} parent=42 // loop_header_branch
                  %204 = sbr.rel (%p202) target = $region57
                $region54: #{cross_attention_forward.1} parent=42 // loop_body
                  %v208 = vld [vmem:[%s206] sm:$0xf]
                  %209 = vst [vmem:[%s207] sm:$0xf] %v208
                  %v210 = vld [vmem:[%s206 + $0xc] sm:$0xf]
                  %211 = vst [vmem:[%s207 + $0x4] sm:$0xf] %v210
                $region55: #{cross_attention_forward.1} parent=42 // loop_footer
                  %s205 = sadd.s32 1, %s201
                $region56: #{cross_attention_forward.1} parent=42 // loop_footer_branch
                  %200 = sbr.rel target = $region52
                $region57: #{cross_attention_forward.1} parent=42 // loop_exit
                  _
              $region43: #{cross_attention_forward.1} parent=27 // pred_fallthru
                _
            $region28: #{cross_attention_forward.1} parent=23 // pred_fallthru
              _
            // Predicated region
            $region29: #{cross_attention_forward.1} parent=23 // pred_check
              _
            $region30: #{cross_attention_forward.1} parent=23 // pred_check_branch
              %175 = sbr.rel (0) target = $region32
            $region31: #{cross_attention_forward.1} parent=23 // pred_region
              loop: start=0, step=1, limit=1
              $region33: #{cross_attention_forward.1} parent=31 // loop_pre_header
                _
              $region34: #{cross_attention_forward.1} parent=31 // loop_header
                %s178 = sphi 0, %s182
                %p179 = scmp.ge.s32.totalorder %s178, 1
                %s183 = sphi %s169, %s169
                %s184 = sphi %s165, %s165
              $region35: #{cross_attention_forward.1} parent=31 // loop_header_branch
                %181 = sbr.rel (%p179) target = $region39
              $region36: #{cross_attention_forward.1} parent=31 // loop_body
                %v185 = vld [vmem:[%s183] sm:$0xf]
                %186 = vst [vmem:[%s184] sm:$0xf] %v185
                %v187 = vld [vmem:[%s183 + $0xc] sm:$0xf]
                %188 = vst [vmem:[%s184 + $0x4] sm:$0xf] %v187
              $region37: #{cross_attention_forward.1} parent=31 // loop_footer
                %s182 = sadd.s32 1, %s178
              $region38: #{cross_attention_forward.1} parent=31 // loop_footer_branch
                %177 = sbr.rel target = $region34
              $region39: #{cross_attention_forward.1} parent=31 // loop_exit
                _
            $region32: #{cross_attention_forward.1} parent=23 // pred_fallthru
              _
          $region24: #{cross_attention_forward.1} parent=19 // pred_fallthru
            _
          %212 = vnop
        $region20: #{cross_attention_forward.1} parent=15 // pred_fallthru
          _
        // Predicated region
        $region58: #{cross_attention_forward.1} parent=15 // pred_check
          %p213 = pneg %p78
        $region59: #{cross_attention_forward.1} parent=15 // pred_check_branch
          %215 = sbr.rel (%p213) target = $region61
        $region60: #{cross_attention_forward.1} parent=15 // pred_region
          %s216 = sand.u32 %s68, 1
          %s217 = sand.u32 %s68, 1
          %s218 = smul.addr %s217, 16
          %s219 = scalar_lea.vmem [#allocation5], %s218
          %s220 = smul.u32 2, %s18
          %s221 = smul.addr %s16, 8
          %s222 = sadd.s32 %s220, %s221
          %s223 = smul.addr %s222, 4
          %s224 = scalar_lea.vmem %s1, %s223
          // Predicated region
          $region62: #{cross_attention_forward.1} parent=60 // pred_check
            _
          $region63: #{cross_attention_forward.1} parent=60 // pred_check_branch
            %226 = sbr.rel (0) target = $region65
          $region64: #{cross_attention_forward.1} parent=60 // pred_region
            // Predicated region
            $region66: #{cross_attention_forward.1} parent=64 // pred_check
              _
            $region67: #{cross_attention_forward.1} parent=64 // pred_check_branch
              %228 = sbr.rel target = $region69
            $region68: #{cross_attention_forward.1} parent=64 // pred_region
              // Predicated region
              $region81: #{cross_attention_forward.1} parent=68 // pred_check
                _
              $region82: #{cross_attention_forward.1} parent=68 // pred_check_branch
                %249 = sbr.rel (0) target = $region84
              $region83: #{cross_attention_forward.1} parent=68 // pred_region
                loop: start=0, step=1, limit=1
                $region85: #{cross_attention_forward.1} parent=83 // loop_pre_header
                  _
                $region86: #{cross_attention_forward.1} parent=83 // loop_header
                  %s251 = sphi 0, %s255
                  %p252 = scmp.ge.s32.totalorder %s251, 1
                  %s256 = sphi %s224, %s224
                  %s257 = sphi %s219, %s219
                $region87: #{cross_attention_forward.1} parent=83 // loop_header_branch
                  %254 = sbr.rel (%p252) target = $region91
                $region88: #{cross_attention_forward.1} parent=83 // loop_body
                  _
                $region89: #{cross_attention_forward.1} parent=83 // loop_footer
                  %s255 = sadd.s32 1, %s251
                $region90: #{cross_attention_forward.1} parent=83 // loop_footer_branch
                  %250 = sbr.rel target = $region86
                $region91: #{cross_attention_forward.1} parent=83 // loop_exit
                  _
                loop: start=0, step=1, limit=1
                $region92: #{cross_attention_forward.1} parent=83 // loop_pre_header
                  _
                $region93: #{cross_attention_forward.1} parent=83 // loop_header
                  %s260 = sphi 0, %s264
                  %p261 = scmp.ge.s32.totalorder %s260, 1
                  %s265 = sphi %s224, %s224
                  %s266 = sphi %s219, %s219
                $region94: #{cross_attention_forward.1} parent=83 // loop_header_branch
                  %263 = sbr.rel (%p261) target = $region98
                $region95: #{cross_attention_forward.1} parent=83 // loop_body
                  %v267 = vld [vmem:[%s265] sm:$0xf]
                  %268 = vst [vmem:[%s266] sm:$0xf] %v267
                  %v269 = vld [vmem:[%s265 + $0x4] sm:$0xf]
                  %270 = vst [vmem:[%s266 + $0x4] sm:$0xf] %v269
                  %v271 = vld [vmem:[%s265 + $0x10] sm:$0xf]
                  %272 = vst [vmem:[%s266 + $0x8] sm:$0xf] %v271
                  %v273 = vld [vmem:[%s265 + $0x14] sm:$0xf]
                  %274 = vst [vmem:[%s266 + $0xc] sm:$0xf] %v273
                $region96: #{cross_attention_forward.1} parent=83 // loop_footer
                  %s264 = sadd.s32 1, %s260
                $region97: #{cross_attention_forward.1} parent=83 // loop_footer_branch
                  %259 = sbr.rel target = $region93
                $region98: #{cross_attention_forward.1} parent=83 // loop_exit
                  _
              $region84: #{cross_attention_forward.1} parent=68 // pred_fallthru
                _
            $region69: #{cross_attention_forward.1} parent=64 // pred_fallthru
              _
            // Predicated region
            $region70: #{cross_attention_forward.1} parent=64 // pred_check
              _
            $region71: #{cross_attention_forward.1} parent=64 // pred_check_branch
              %230 = sbr.rel (0) target = $region73
            $region72: #{cross_attention_forward.1} parent=64 // pred_region
              loop: start=0, step=1, limit=1
              $region74: #{cross_attention_forward.1} parent=72 // loop_pre_header
                _
              $region75: #{cross_attention_forward.1} parent=72 // loop_header
                %s233 = sphi 0, %s237
                %p234 = scmp.ge.s32.totalorder %s233, 1
                %s238 = sphi %s224, %s224
                %s239 = sphi %s219, %s219
              $region76: #{cross_attention_forward.1} parent=72 // loop_header_branch
                %236 = sbr.rel (%p234) target = $region80
              $region77: #{cross_attention_forward.1} parent=72 // loop_body
                %v240 = vld [vmem:[%s238] sm:$0xf]
                %241 = vst [vmem:[%s239] sm:$0xf] %v240
                %v242 = vld [vmem:[%s238 + $0x4] sm:$0xf]
                %243 = vst [vmem:[%s239 + $0x4] sm:$0xf] %v242
                %v244 = vld [vmem:[%s238 + $0x10] sm:$0xf]
                %245 = vst [vmem:[%s239 + $0x8] sm:$0xf] %v244
                %v246 = vld [vmem:[%s238 + $0x14] sm:$0xf]
                %247 = vst [vmem:[%s239 + $0xc] sm:$0xf] %v246
              $region78: #{cross_attention_forward.1} parent=72 // loop_footer
                %s237 = sadd.s32 1, %s233
              $region79: #{cross_attention_forward.1} parent=72 // loop_footer_branch
                %232 = sbr.rel target = $region75
              $region80: #{cross_attention_forward.1} parent=72 // loop_exit
                _
            $region73: #{cross_attention_forward.1} parent=64 // pred_fallthru
              _
          $region65: #{cross_attention_forward.1} parent=60 // pred_fallthru
            _
          %275 = vnop
        $region61: #{cross_attention_forward.1} parent=15 // pred_fallthru
          _
        // Predicated region
        $region99: #{cross_attention_forward.1} parent=15 // pred_check
          %p276 = pneg %p106
        $region100: #{cross_attention_forward.1} parent=15 // pred_check_branch
          %278 = sbr.rel (%p276) target = $region102
        $region101: #{cross_attention_forward.1} parent=15 // pred_region
          %s279 = sand.u32 %s96, 1
          %s280 = sand.u32 %s96, 1
          %s281 = smul.addr %s280, 16
          %s282 = scalar_lea.vmem [#allocation6], %s281
          %s283 = smul.u32 2, %s18
          %s284 = smul.addr %s16, 8
          %s285 = sadd.s32 %s283, %s284
          %s286 = smul.addr %s285, 4
          %s287 = scalar_lea.vmem %s2, %s286
          // Predicated region
          $region103: #{cross_attention_forward.1} parent=101 // pred_check
            _
          $region104: #{cross_attention_forward.1} parent=101 // pred_check_branch
            %289 = sbr.rel (0) target = $region106
          $region105: #{cross_attention_forward.1} parent=101 // pred_region
            // Predicated region
            $region107: #{cross_attention_forward.1} parent=105 // pred_check
              _
            $region108: #{cross_attention_forward.1} parent=105 // pred_check_branch
              %291 = sbr.rel target = $region110
            $region109: #{cross_attention_forward.1} parent=105 // pred_region
              // Predicated region
              $region122: #{cross_attention_forward.1} parent=109 // pred_check
                _
              $region123: #{cross_attention_forward.1} parent=109 // pred_check_branch
                %312 = sbr.rel (0) target = $region125
              $region124: #{cross_attention_forward.1} parent=109 // pred_region
                loop: start=0, step=1, limit=1
                $region126: #{cross_attention_forward.1} parent=124 // loop_pre_header
                  _
                $region127: #{cross_attention_forward.1} parent=124 // loop_header
                  %s314 = sphi 0, %s318
                  %p315 = scmp.ge.s32.totalorder %s314, 1
                  %s319 = sphi %s287, %s287
                  %s320 = sphi %s282, %s282
                $region128: #{cross_attention_forward.1} parent=124 // loop_header_branch
                  %317 = sbr.rel (%p315) target = $region132
                $region129: #{cross_attention_forward.1} parent=124 // loop_body
                  _
                $region130: #{cross_attention_forward.1} parent=124 // loop_footer
                  %s318 = sadd.s32 1, %s314
                $region131: #{cross_attention_forward.1} parent=124 // loop_footer_branch
                  %313 = sbr.rel target = $region127
                $region132: #{cross_attention_forward.1} parent=124 // loop_exit
                  _
                loop: start=0, step=1, limit=1
                $region133: #{cross_attention_forward.1} parent=124 // loop_pre_header
                  _
                $region134: #{cross_attention_forward.1} parent=124 // loop_header
                  %s323 = sphi 0, %s327
                  %p324 = scmp.ge.s32.totalorder %s323, 1
                  %s328 = sphi %s287, %s287
                  %s329 = sphi %s282, %s282
                $region135: #{cross_attention_forward.1} parent=124 // loop_header_branch
                  %326 = sbr.rel (%p324) target = $region139
                $region136: #{cross_attention_forward.1} parent=124 // loop_body
                  %v330 = vld [vmem:[%s328] sm:$0xf]
                  %331 = vst [vmem:[%s329] sm:$0xf] %v330
                  %v332 = vld [vmem:[%s328 + $0x4] sm:$0xf]
                  %333 = vst [vmem:[%s329 + $0x4] sm:$0xf] %v332
                  %v334 = vld [vmem:[%s328 + $0x10] sm:$0xf]
                  %335 = vst [vmem:[%s329 + $0x8] sm:$0xf] %v334
                  %v336 = vld [vmem:[%s328 + $0x14] sm:$0xf]
                  %337 = vst [vmem:[%s329 + $0xc] sm:$0xf] %v336
                $region137: #{cross_attention_forward.1} parent=124 // loop_footer
                  %s327 = sadd.s32 1, %s323
                $region138: #{cross_attention_forward.1} parent=124 // loop_footer_branch
                  %322 = sbr.rel target = $region134
                $region139: #{cross_attention_forward.1} parent=124 // loop_exit
                  _
              $region125: #{cross_attention_forward.1} parent=109 // pred_fallthru
                _
            $region110: #{cross_attention_forward.1} parent=105 // pred_fallthru
              _
            // Predicated region
            $region111: #{cross_attention_forward.1} parent=105 // pred_check
              _
            $region112: #{cross_attention_forward.1} parent=105 // pred_check_branch
              %293 = sbr.rel (0) target = $region114
            $region113: #{cross_attention_forward.1} parent=105 // pred_region
              loop: start=0, step=1, limit=1
              $region115: #{cross_attention_forward.1} parent=113 // loop_pre_header
                _
              $region116: #{cross_attention_forward.1} parent=113 // loop_header
                %s296 = sphi 0, %s300
                %p297 = scmp.ge.s32.totalorder %s296, 1
                %s301 = sphi %s287, %s287
                %s302 = sphi %s282, %s282
              $region117: #{cross_attention_forward.1} parent=113 // loop_header_branch
                %299 = sbr.rel (%p297) target = $region121
              $region118: #{cross_attention_forward.1} parent=113 // loop_body
                %v303 = vld [vmem:[%s301] sm:$0xf]
                %304 = vst [vmem:[%s302] sm:$0xf] %v303
                %v305 = vld [vmem:[%s301 + $0x4] sm:$0xf]
                %306 = vst [vmem:[%s302 + $0x4] sm:$0xf] %v305
                %v307 = vld [vmem:[%s301 + $0x10] sm:$0xf]
                %308 = vst [vmem:[%s302 + $0x8] sm:$0xf] %v307
                %v309 = vld [vmem:[%s301 + $0x14] sm:$0xf]
                %310 = vst [vmem:[%s302 + $0xc] sm:$0xf] %v309
              $region119: #{cross_attention_forward.1} parent=113 // loop_footer
                %s300 = sadd.s32 1, %s296
              $region120: #{cross_attention_forward.1} parent=113 // loop_footer_branch
                %295 = sbr.rel target = $region116
              $region121: #{cross_attention_forward.1} parent=113 // loop_exit
                _
            $region114: #{cross_attention_forward.1} parent=105 // pred_fallthru
              _
          $region106: #{cross_attention_forward.1} parent=101 // pred_fallthru
            _
          %338 = vnop
        $region102: #{cross_attention_forward.1} parent=15 // pred_fallthru
          _
      $region16: #{cross_attention_forward.1} parent=5 // pred_fallthru
        _
      %p339 = scmp.le.s32.totalorder 1, %s9
      %p340 = scmp.lt.s32.totalorder %s9, 13
      %p341 = pnand %p339, %p340
      %p342 = pneg %p341
      // Predicated region
      $region140: #{cross_attention_forward.1} parent=5 // pred_check
        _
      $region141: #{cross_attention_forward.1} parent=5 // pred_check_branch
        %344 = sbr.rel (%p341) target = $region143
      $region142: #{cross_attention_forward.1} parent=5 // pred_region
        %s345 = ssub.s32 %s9, 1
        %s346 = sand.u32 %s43, 1
        %s347 = sand.u32 %s43, 1
        %s348 = smul.addr %s347, 8
        %s349 = scalar_lea.vmem [#allocation4], %s348
        // Predicated region
        $region144: #{cross_attention_forward.1} parent=142 // pred_check
          %p350 = pneg %p56
        $region145: #{cross_attention_forward.1} parent=142 // pred_check_branch
          %352 = sbr.rel (%p350) target = $region147
        $region146: #{cross_attention_forward.1} parent=142 // pred_region
          _
        $region147: #{cross_attention_forward.1} parent=142 // pred_fallthru
          _
        %s353 = sand.u32 %s71, 1
        %s354 = sand.u32 %s71, 1
        %s355 = smul.addr %s354, 16
        %s356 = scalar_lea.vmem [#allocation5], %s355
        // Predicated region
        $region148: #{cross_attention_forward.1} parent=142 // pred_check
          %p357 = pneg %p84
        $region149: #{cross_attention_forward.1} parent=142 // pred_check_branch
          %359 = sbr.rel (%p357) target = $region151
        $region150: #{cross_attention_forward.1} parent=142 // pred_region
          _
        $region151: #{cross_attention_forward.1} parent=142 // pred_fallthru
          _
        %s360 = sand.u32 %s99, 1
        %s361 = sand.u32 %s99, 1
        %s362 = smul.addr %s361, 16
        %s363 = scalar_lea.vmem [#allocation6], %s362
        // Predicated region
        $region152: #{cross_attention_forward.1} parent=142 // pred_check
          %p364 = pneg %p112
        $region153: #{cross_attention_forward.1} parent=142 // pred_check_branch
          %366 = sbr.rel (%p364) target = $region155
        $region154: #{cross_attention_forward.1} parent=142 // pred_region
          _
        $region155: #{cross_attention_forward.1} parent=142 // pred_fallthru
          _
        %s367 = sand.u32 %s43, 1
        %s368 = sand.u32 %s43, 1
        %s369 = smul.addr %s368, 8
        %s370 = scalar_lea.vmem [#allocation4], %s369
        %p371 = pneg %p56
        %p372 = pneg %p53
        %s373 = sand.u32 %s71, 1
        %s374 = sand.u32 %s71, 1
        %s375 = smul.addr %s374, 16
        %s376 = scalar_lea.vmem [#allocation5], %s375
        %p377 = pneg %p84
        %p378 = pneg %p81
        %s379 = sand.u32 %s99, 1
        %s380 = sand.u32 %s99, 1
        %s381 = smul.addr %s380, 16
        %s382 = scalar_lea.vmem [#allocation6], %s381
        %p383 = pneg %p112
        %p384 = pneg %p109
        %p385 = pneg %p140
        %p386 = pneg %p137
        %p387 = scmp.lt.s32.totalorder %s19, 1
        %s388 = scalar_select %p387, %s19, 1
        %p389 = scmp.lt.s32.totalorder %s20, 2
        %s390 = scalar_select %p389, %s20, 2
        %s391 = smul.addr %s388, 3
        %s392 = sadd.s32 %s390, %s391
        %s393 = smul.addr %s392, 8
        %s394 = scalar_lea.vmem %s3, %s393
        %s395 = smul.u32 2, %s21
        %s396 = smul.u32 2, %s21
        %p397 = scmp.lt.s32.totalorder %s19, 1
        %s398 = scalar_select %p397, %s19, 1
        %p399 = scmp.lt.s32.totalorder %s20, 2
        %s400 = scalar_select %p399, %s20, 2
        %s401 = smul.addr %s398, 3
        %s402 = sadd.s32 %s400, %s401
        %s403 = smul.addr %s402, 8
        %s404 = scalar_lea.vmem %s3, %s403
        %p406 = scmp.eq.s32.totalorder %s21, 0
        // Predicated region
        $region156: #{cross_attention_forward.1} parent=142 // pred_check
          %p407 = pneg %p406
        $region157: #{cross_attention_forward.1} parent=142 // pred_check_branch
          %409 = sbr.rel (%p407) target = $region159
        $region158: #{cross_attention_forward.1} parent=142 // pred_region
          %vm410 = vcmask 7168
          %411 = vst.msk [vmem:[#allocation2] sm:$0xff] %vm410, -inf
          %412 = vst.msk [vmem:[#allocation2 + $0x8] sm:$0xff] %vm410, -inf
          %vm413 = vcmask 15368
          %414 = vst.msk [vmem:[#allocation2] sm:$0xff] %vm413, 0.0
          %415 = vst.msk [vmem:[#allocation2 + $0x8] sm:$0xff] %vm413, 0.0
          %vm416 = vcmask 261120
          %417 = vst.msk [vmem:[#allocation3] sm:$0xff] %vm416, 0.0
          %418 = vst.msk [vmem:[#allocation3 + $0x8] sm:$0xff] %vm416, 0.0
        $region159: #{cross_attention_forward.1} parent=142 // pred_fallthru
          _
        %v419 = vld [vmem:[%s349] sm:$0xf]
        %v420 = vld [vmem:[%s349 + $0x4] sm:$0xf]
        %v421 = vld [vmem:[%s356] sm:$0xf]
        %v422 = vld [vmem:[%s356 + $0x4] sm:$0xf]
        %v423 = vld [vmem:[%s356 + $0x8] sm:$0xf]
        %v424 = vld [vmem:[%s356 + $0xc] sm:$0xf]
        %v427 = vunpack.c.l.b16 %v421
        %v428 = vunpack.c.l.b16 %v422
        %v429 = vpack.c.b16 %v428, %v427
        %vm430 = vcmask 261120
        %v432 = vsel %vm430, %v419, 0
        %v435 = vsel %vm430, %v429, 0
        %437 = vmatprep.subr.bf16.mxu0 0
        %438 = vmatpush1.bf16.xpose.msra.mxu0 %v435
        %439 = vmatprep.subr.bf16.mxu0 0
        %440 = vmatpush1.bf16.xpose.msra.mxu0 0
        %441 = vmatprep.subr.bf16.mxu0 0
        %442 = vmatpush1.bf16.xpose.msra.mxu0 0
        %443 = vmatprep.subr.bf16.mxu0 0
        %444 = vmatpush1.bf16.xpose.msra.mxu0 0
        %445 = vmatprep.subr.bf16.mxu0 0
        %446 = vmatpush1.bf16.xpose.msra.mxu0 0
        %447 = vmatprep.subr.bf16.mxu0 0
        %448 = vmatpush1.bf16.xpose.msra.mxu0 0
        %449 = vmatprep.subr.bf16.mxu0 0
        %450 = vmatpush1.bf16.xpose.msra.mxu0 0
        %451 = vmatprep.subr.bf16.mxu0 0
        %452 = vmatpush1.bf16.xpose.msra.mxu0 0
        %453 = vmatprep.subr.bf16.mxu0 0
        %454 = vmatpush1.bf16.xpose.msra.mxu0 0
        %455 = vmatprep.subr.bf16.mxu0 0
        %456 = vmatpush1.bf16.xpose.msra.mxu0 0
        %457 = vmatprep.subr.bf16.mxu0 0
        %458 = vmatpush1.bf16.xpose.msra.mxu0 0
        %459 = vmatprep.subr.bf16.mxu0 0
        %460 = vmatpush1.bf16.xpose.msra.mxu0 0
        %461 = vmatprep.subr.bf16.mxu0 0
        %462 = vmatpush1.bf16.xpose.msra.mxu0 0
        %463 = vmatprep.subr.bf16.mxu0 0
        %464 = vmatpush1.bf16.xpose.msra.mxu0 0
        %465 = vmatprep.subr.bf16.mxu0 0
        %466 = vmatpush1.bf16.xpose.msra.mxu0 0
        %467 = vmatprep.subr.bf16.mxu0 0
        %468 = vmatpush1.bf16.xpose.msra.mxu0 0
        %469 = vmatprep.mubr.bf16.mxu0 0
        %470 = vmatmul.mubr.bf16.gmra.mrb[0].mxu0 %v432
        %v471 = vpop.f32.mrb[0].mxu0
        %v472 = vadd.f32 0.0, %v471
        %v473 = vpop.f32.mrb[0].mxu0
        %v474 = vpop.f32.mrb[0].mxu0
        %v475 = vpop.f32.mrb[0].mxu0
        %476 = vdwg.mxu0
        %v479 = vunpack.c.l.b16 %v423
        %v480 = vunpack.c.l.b16 %v424
        %v481 = vpack.c.b16 %v480, %v479
        %v483 = vsel %vm430, %v420, 0
        %v486 = vsel %vm430, %v481, 0
        %488 = vmatprep.subr.bf16.mxu0 0
        %489 = vmatpush1.bf16.xpose.msra.mxu0 %v486
        %490 = vmatprep.subr.bf16.mxu0 0
        %491 = vmatpush1.bf16.xpose.msra.mxu0 0
        %492 = vmatprep.subr.bf16.mxu0 0
        %493 = vmatpush1.bf16.xpose.msra.mxu0 0
        %494 = vmatprep.subr.bf16.mxu0 0
        %495 = vmatpush1.bf16.xpose.msra.mxu0 0
        %496 = vmatprep.subr.bf16.mxu0 0
        %497 = vmatpush1.bf16.xpose.msra.mxu0 0
        %498 = vmatprep.subr.bf16.mxu0 0
        %499 = vmatpush1.bf16.xpose.msra.mxu0 0
        %500 = vmatprep.subr.bf16.mxu0 0
        %501 = vmatpush1.bf16.xpose.msra.mxu0 0
        %502 = vmatprep.subr.bf16.mxu0 0
        %503 = vmatpush1.bf16.xpose.msra.mxu0 0
        %504 = vmatprep.subr.bf16.mxu0 0
        %505 = vmatpush1.bf16.xpose.msra.mxu0 0
        %506 = vmatprep.subr.bf16.mxu0 0
        %507 = vmatpush1.bf16.xpose.msra.mxu0 0
        %508 = vmatprep.subr.bf16.mxu0 0
        %509 = vmatpush1.bf16.xpose.msra.mxu0 0
        %510 = vmatprep.subr.bf16.mxu0 0
        %511 = vmatpush1.bf16.xpose.msra.mxu0 0
        %512 = vmatprep.subr.bf16.mxu0 0
        %513 = vmatpush1.bf16.xpose.msra.mxu0 0
        %514 = vmatprep.subr.bf16.mxu0 0
        %515 = vmatpush1.bf16.xpose.msra.mxu0 0
        %516 = vmatprep.subr.bf16.mxu0 0
        %517 = vmatpush1.bf16.xpose.msra.mxu0 0
        %518 = vmatprep.subr.bf16.mxu0 0
        %519 = vmatpush1.bf16.xpose.msra.mxu0 0
        %520 = vmatprep.mubr.bf16.mxu0 0
        %521 = vmatmul.mubr.bf16.gmra.mrb[0].mxu0 %v483
        %v522 = vpop.f32.mrb[0].mxu0
        %v523 = vadd.f32 0.0, %v522
        %v524 = vpop.f32.mrb[0].mxu0
        %v525 = vpop.f32.mrb[0].mxu0
        %v526 = vpop.f32.mrb[0].mxu0
        %527 = vdwg.mxu0
        %s528 = smul.u32 %s21, 16
        %v529 = vlaneseq
        %v530 = vand.u32 %v529, 127
        %v531 = vstv %s528
        %v532 = vadd.s32 %v531, %v530
        %vm533 = vcmp.lt.s32.totalorder %v532, 28
        %v534 = vsel %vm533, 1, 0
        %vm535 = vcmp.eq.s32.totalorder %v534, 1
        %v536 = vsel %vm535, %v472, -1e+30
        %v537 = vsel %vm535, %v523, -1e+30
        %v538 = vld [vmem:[#allocation2] sm:$0xff]
        %v539 = vld [vmem:[#allocation2 + $0x8] sm:$0xff]
        %vm540 = vcmask 130048
        %v541 = vsel %vm540, %v536, -inf
        %542 = vmax.xlane.f32.xlu0 %v541
        %v543 = vpop.xlane.xlu0 %542
        %v544 = vsel %vm540, %v537, -inf
        %545 = vmax.xlane.f32.xlu0 %v544
        %v546 = vpop.xlane.xlu0 %545
        %v547 = vmax.f32 %v538, %v543
        %v548 = vmax.f32 %v539, %v546
        %v549 = vsub.f32 %v538, %v547
        %v550 = vsub.f32 %v539, %v548
        %v551 = vmul.f32 %v549, 1.442695
        %v552 = vpow.pop %v551
        %v553 = vmul.f32 %v550, 1.442695
        %v554 = vpow.pop %v553
        %556 = vset.pattern.permute.xlu0 0
        %557 = vperm.xlu0 %556, %v547
        %v558 = vpop.permute.xlu0 %557
        %561 = vset.pattern.permute.xlu0 0
        %562 = vperm.xlu0 %561, %v548
        %v563 = vpop.permute.xlu0 %562
        %v565 = vsub.f32 %v536, %v558
        %v566 = vsub.f32 %v537, %v563
        %v567 = vmul.f32 %v565, 1.442695
        %v568 = vpow.pop %v567
        %v569 = vmul.f32 %v566, 1.442695
        %v570 = vpow.pop %v569
        %v571 = vsel %vm540, %v568, 0.0
        %572 = vadd.xlane.f32.xlu0 %v571
        %v573 = vpop.xlane.xlu0 %572
        %v574 = vsel %vm540, %v570, 0.0
        %575 = vadd.xlane.f32.xlu0 %v574
        %v576 = vpop.xlane.xlu0 %575
        %v577 = vpack.c.bf16 %v568, %v568
        %v578 = vpack.c.bf16 %v570, %v570
        %581 = vrot.lane.b32.xlu0 %v538, 127
        %v582 = vpop.permute.xlu0 %581
        %583 = vrot.lane.b32.xlu0 %v539, 127
        %v584 = vpop.permute.xlu0 %583
        %v587 = vmul.f32 %v552, %v582
        %v588 = vmul.f32 %v554, %v584
        %v589 = vadd.f32 %v587, %v573
        %v590 = vadd.f32 %v588, %v576
        %593 = vrot.lane.b32.xlu0 %v589, 1
        %v594 = vpop.permute.xlu0 %593
        %595 = vrot.lane.b32.xlu0 %v590, 1
        %v596 = vpop.permute.xlu0 %595
        %vm599 = vcmask 15368
        %600 = vst.msk [vmem:[#allocation2] sm:$0xff] %vm599, %v594
        %601 = vst.msk [vmem:[#allocation2 + $0x8] sm:$0xff] %vm599, %v596
        %v602 = vld [vmem:[#allocation3] sm:$0xff]
        %v603 = vld [vmem:[#allocation3 + $0x8] sm:$0xff]
        %605 = vset.pattern.permute.xlu0 0
        %606 = vperm.xlu0 %605, %v552
        %v607 = vpop.permute.xlu0 %606
        %610 = vset.pattern.permute.xlu0 0
        %611 = vperm.xlu0 %610, %v554
        %v612 = vpop.permute.xlu0 %611
        %v614 = vmul.f32 %v607, %v602
        %v615 = vmul.f32 %v612, %v603
        %v616 = vld [vmem:[%s363] sm:$0xf]
        %v617 = vld [vmem:[%s363 + $0x4] sm:$0xf]
        %v618 = vld [vmem:[%s363 + $0x8] sm:$0xf]
        %v619 = vld [vmem:[%s363 + $0xc] sm:$0xf]
        %v622 = vunpack.c.l.b16 %v616
        %v623 = vunpack.c.l.b16 %v617
        %v624 = vpack.c.b16 %v623, %v622
        %v627 = vsel %vm540, %v577, 0
        %629 = vmatprep.subr.bf16.mxu0 0
        %630 = vmatpush1.bf16.msra.mxu0 %v624
        %631 = vmatprep.subr.bf16.mxu0 0
        %632 = vmatpush1.bf16.msra.mxu0 0
        %633 = vmatprep.subr.bf16.mxu0 0
        %634 = vmatpush1.bf16.msra.mxu0 0
        %635 = vmatprep.subr.bf16.mxu0 0
        %636 = vmatpush1.bf16.msra.mxu0 0
        %637 = vmatprep.subr.bf16.mxu0 0
        %638 = vmatpush1.bf16.msra.mxu0 0
        %639 = vmatprep.subr.bf16.mxu0 0
        %640 = vmatpush1.bf16.msra.mxu0 0
        %641 = vmatprep.subr.bf16.mxu0 0
        %642 = vmatpush1.bf16.msra.mxu0 0
        %643 = vmatprep.subr.bf16.mxu0 0
        %644 = vmatpush1.bf16.msra.mxu0 0
        %645 = vmatprep.subr.bf16.mxu0 0
        %646 = vmatpush1.bf16.msra.mxu0 0
        %647 = vmatprep.subr.bf16.mxu0 0
        %648 = vmatpush1.bf16.msra.mxu0 0
        %649 = vmatprep.subr.bf16.mxu0 0
        %650 = vmatpush1.bf16.msra.mxu0 0
        %651 = vmatprep.subr.bf16.mxu0 0
        %652 = vmatpush1.bf16.msra.mxu0 0
        %653 = vmatprep.subr.bf16.mxu0 0
        %654 = vmatpush1.bf16.msra.mxu0 0
        %655 = vmatprep.subr.bf16.mxu0 0
        %656 = vmatpush1.bf16.msra.mxu0 0
        %657 = vmatprep.subr.bf16.mxu0 0
        %658 = vmatpush1.bf16.msra.mxu0 0
        %659 = vmatprep.subr.bf16.mxu0 0
        %660 = vmatpush1.bf16.msra.mxu0 0
        %661 = vmatprep.mubr.bf16.mxu0 0
        %662 = vmatmul.mubr.bf16.gmra.mrb[0].mxu0 %v627
        %v663 = vpop.f32.mrb[0].mxu0
        %v664 = vadd.f32 0.0, %v663
        %v665 = vpop.f32.mrb[0].mxu0
        %v666 = vpop.f32.mrb[0].mxu0
        %v667 = vpop.f32.mrb[0].mxu0
        %668 = vdwg.mxu0
        %v671 = vunpack.c.l.b16 %v618
        %v672 = vunpack.c.l.b16 %v619
        %v673 = vpack.c.b16 %v672, %v671
        %v676 = vsel %vm540, %v578, 0
        %678 = vmatprep.subr.bf16.mxu0 0
        %679 = vmatpush1.bf16.msra.mxu0 %v673
        %680 = vmatprep.subr.bf16.mxu0 0
        %681 = vmatpush1.bf16.msra.mxu0 0
        %682 = vmatprep.subr.bf16.mxu0 0
        %683 = vmatpush1.bf16.msra.mxu0 0
        %684 = vmatprep.subr.bf16.mxu0 0
        %685 = vmatpush1.bf16.msra.mxu0 0
        %686 = vmatprep.subr.bf16.mxu0 0
        %687 = vmatpush1.bf16.msra.mxu0 0
        %688 = vmatprep.subr.bf16.mxu0 0
        %689 = vmatpush1.bf16.msra.mxu0 0
        %690 = vmatprep.subr.bf16.mxu0 0
        %691 = vmatpush1.bf16.msra.mxu0 0
        %692 = vmatprep.subr.bf16.mxu0 0
        %693 = vmatpush1.bf16.msra.mxu0 0
        %694 = vmatprep.subr.bf16.mxu0 0
        %695 = vmatpush1.bf16.msra.mxu0 0
        %696 = vmatprep.subr.bf16.mxu0 0
        %697 = vmatpush1.bf16.msra.mxu0 0
        %698 = vmatprep.subr.bf16.mxu0 0
        %699 = vmatpush1.bf16.msra.mxu0 0
        %700 = vmatprep.subr.bf16.mxu0 0
        %701 = vmatpush1.bf16.msra.mxu0 0
        %702 = vmatprep.subr.bf16.mxu0 0
        %703 = vmatpush1.bf16.msra.mxu0 0
        %704 = vmatprep.subr.bf16.mxu0 0
        %705 = vmatpush1.bf16.msra.mxu0 0
        %706 = vmatprep.subr.bf16.mxu0 0
        %707 = vmatpush1.bf16.msra.mxu0 0
        %708 = vmatprep.subr.bf16.mxu0 0
        %709 = vmatpush1.bf16.msra.mxu0 0
        %710 = vmatprep.mubr.bf16.mxu0 0
        %711 = vmatmul.mubr.bf16.gmra.mrb[0].mxu0 %v676
        %v712 = vpop.f32.mrb[0].mxu0
        %v713 = vadd.f32 0.0, %v712
        %v714 = vpop.f32.mrb[0].mxu0
        %v715 = vpop.f32.mrb[0].mxu0
        %v716 = vpop.f32.mrb[0].mxu0
        %717 = vdwg.mxu0
        %v718 = vadd.f32 %v614, %v664
        %v719 = vadd.f32 %v615, %v713
        %720 = vst.msk [vmem:[#allocation3] sm:$0xff] %vm430, %v718
        %721 = vst.msk [vmem:[#allocation3 + $0x8] sm:$0xff] %vm430, %v719
        %vm722 = vcmask 7168
        %723 = vst.msk [vmem:[#allocation2] sm:$0xff] %vm722, %v547
        %724 = vst.msk [vmem:[#allocation2 + $0x8] sm:$0xff] %vm722, %v548
        %p725 = scmp.eq.s32.totalorder %s21, 1
        // Predicated region
        $region160: #{cross_attention_forward.1} parent=142 // pred_check
          %p726 = pneg %p725
        $region161: #{cross_attention_forward.1} parent=142 // pred_check_branch
          %728 = sbr.rel (%p726) target = $region163
        $region162: #{cross_attention_forward.1} parent=142 // pred_region
          %v729 = vld [vmem:[#allocation2] sm:$0xff]
          %v730 = vld [vmem:[#allocation2 + $0x8] sm:$0xff]
          %v731 = vrcp.pop %v729
          %v732 = vrcp.pop %v730
          %v733 = vld [vmem:[#allocation3] sm:$0xff]
          %735 = vset.pattern.permute.xlu0 1
          %736 = vperm.xlu0 %735, %v731
          %v737 = vpop.permute.xlu0 %736
          %v739 = vmul.f32 %v733, %v737
          %740 = vst.msk [vmem:[%s404] sm:$0xff] %vm430, %v739
          %s741 = scalar_lea.vmem [#allocation3], 8
          %v742 = vld [vmem:[%s741] sm:$0xff]
          %744 = vset.pattern.permute.xlu0 1
          %745 = vperm.xlu0 %744, %v732
          %v746 = vpop.permute.xlu0 %745
          %v748 = vmul.f32 %v742, %v746
          %750 = vrot.lane.b32.xlu0 %v748, 32
          %v751 = vpop.permute.xlu0 %750
          %vm753 = vcmask 523520
          %754 = vst.msk [vmem:[%s404] sm:$0xff] %vm753, %v751
        $region163: #{cross_attention_forward.1} parent=142 // pred_fallthru
          _
        %p755 = scmp.lt.s32.totalorder %s19, 1
        %s756 = scalar_select %p755, %s19, 1
        %p757 = scmp.lt.s32.totalorder %s20, 2
        %s758 = scalar_select %p757, %s20, 2
        %s759 = smul.addr %s756, 3
        %s760 = sadd.s32 %s758, %s759
        %s761 = smul.addr %s760, 8
        %s762 = scalar_lea.vmem %s3, %s761
        // Predicated region
        $region164: #{cross_attention_forward.1} parent=142 // pred_check
          %p763 = pneg %p137
        $region165: #{cross_attention_forward.1} parent=142 // pred_check_branch
          %765 = sbr.rel (%p763) target = $region167
        $region166: #{cross_attention_forward.1} parent=142 // pred_region
          _
        $region167: #{cross_attention_forward.1} parent=142 // pred_fallthru
          _
      $region143: #{cross_attention_forward.1} parent=5 // pred_fallthru
        _
      %p766 = scmp.le.s32.totalorder 2, %s9
      // Predicated region
      $region168: #{cross_attention_forward.1} parent=5 // pred_check
        %p767 = pneg %p766
      $region169: #{cross_attention_forward.1} parent=5 // pred_check_branch
        %769 = sbr.rel (%p767) target = $region171
      $region170: #{cross_attention_forward.1} parent=5 // pred_region
        %s770 = ssub.s32 %s9, 2
        // Predicated region
        $region172: #{cross_attention_forward.1} parent=170 // pred_check
          %p771 = pneg %p143
        $region173: #{cross_attention_forward.1} parent=170 // pred_check_branch
          %773 = sbr.rel (%p771) target = $region175
        $region174: #{cross_attention_forward.1} parent=170 // pred_region
          %p774 = scmp.lt.s32.totalorder %s22, 1
          %s775 = scalar_select %p774, %s22, 1
          %p776 = scmp.lt.s32.totalorder %s23, 2
          %s777 = scalar_select %p776, %s23, 2
          %s778 = smul.addr %s775, 3
          %s779 = sadd.s32 %s777, %s778
          %s780 = smul.addr %s779, 8
          %s781 = scalar_lea.vmem %s3, %s780
        $region175: #{cross_attention_forward.1} parent=170 // pred_fallthru
          _
      $region171: #{cross_attention_forward.1} parent=5 // pred_fallthru
        _
    $region6: #{cross_attention_forward.1} parent=1 // loop_footer
      %s13 = sadd.s32 1, %s9
    $region7: #{cross_attention_forward.1} parent=1 // loop_footer_branch
      %8 = sbr.rel target = $region3
    $region8: #{cross_attention_forward.1} parent=1 // loop_exit
      _

</llo_original>
